<compile_context>
chip_gen: v5e
topology: v5e:2x2
jax: 0.10.0
libtpu: 0.0.40
codegen_flags: <defaults>
</compile_context>

<pallas_src>
import math
import numpy as np
import jax
import jax.numpy as jnp
from jax import lax
from jax.experimental import pallas as pl
from jax.experimental.pallas import tpu as pltpu

# ArcFaceHead defaults: s=30.0, m=0.5, easy_margin=False.
S = 30.0
M = 0.5
COS_M = math.cos(M)
SIN_M = math.sin(M)
TH = math.cos(math.pi - M)
MM = math.sin(math.pi - M) * M
EPS = 1e-12  # F.normalize default eps


def _normalize_x_kernel(x_ref, o_ref):
    """F.normalize(x): x / max(||x||, eps) == x * rsqrt(max(sum(x^2), eps^2))."""
    x = x_ref[...]
    inv = lax.rsqrt(jnp.maximum(jnp.sum(x * x, axis=-1, keepdims=True), EPS * EPS))
    o_ref[...] = x * inv


def _cos_tile(xn_ref, w_ref):
    """Clamped cosine logits for one (TN, Cf) weight tile (native torch layout)."""
    w = w_ref[...]                                                   # (TN, Cf)
    # 1 / max(||w_row||, eps): per-row rsqrt (EUP) + per-row scale (VPU),
    # no cross-lane relayout needed since the norm broadcasts along lanes.
    inv_wn = lax.rsqrt(
        jnp.maximum(jnp.sum(w * w, axis=1, keepdims=True), EPS * EPS))  # (TN, 1)
    # "NT" matmul: contract the feature (last) dim of both operands -> (B, TN).
    cos = lax.dot_general(
        xn_ref[...], w * inv_wn,
        dimension_numbers=(((1,), (1,)), ((), ())),
        preferred_element_type=jnp.float32)
    return jnp.clip(cos, -1.0, 1.0)


def _arcface_cos_kernel(xn_ref, w_ref, out_ref):
    # labels is None path: logits = cos_theta * s
    out_ref[...] = _cos_tile(xn_ref, w_ref) * S


def _arcface_margin_kernel(xn_ref, w_ref, labels_ref, out_ref):
    cos = _cos_tile(xn_ref, w_ref)
    sin = jnp.sqrt(jnp.maximum(1.0 - cos * cos, 0.0))
    cos_m = jnp.where(cos > TH, cos * COS_M - sin * SIN_M, cos - MM)
    b, tn = out_ref.shape
    # one-hot against ABSOLUTE class indices (this tile starts at j * TN).
    col = lax.broadcasted_iota(jnp.int32, (b, tn), 1) + pl.program_id(0) * tn
    one_hot = col == labels_ref[...]          # labels (B, 1) broadcast over lanes
    out_ref[...] = jnp.where(one_hot, cos_m, cos) * S


def arcface_head(x, weight, labels=None, *, class_tile=4096):
    """ArcFaceHead forward.

    x:      (B, in_features) float32 features.
    weight: (out_features, in_features) float32 (torch nn.Parameter layout).
    labels: optional (B,) integer labels.
    class_tile: class-dim tile width (multiple of 128).  Default 4096 is sized
                for v7x's 64 MiB VMEM with f32 Cf=512 weights; v5e/v6e can go
                larger.
    """
    B, Cf = x.shape
    NC, Cf_w = weight.shape
    assert Cf_w == Cf
    assert class_tile % 128 == 0

    x = x.astype(jnp.float32)
    weight = weight.astype(jnp.float32)

    # Lane-dense class tile; ragged last tile handled by Pallas boundary blocks
    # (no weight padding / transpose copies in HBM).
    tn = min(class_tile, pl.cdiv(NC, 128) * 128)
    grid = (pl.cdiv(NC, tn),)

    vmem_full = pl.BlockSpec(memory_space=pltpu.MemorySpace.VMEM)

    # ---- Stage 1: F.normalize(x), computed exactly once (hoisted out of the
    # class-tile loop). ----
    x_norm = pl.pallas_call(
        _normalize_x_kernel,
        out_shape=jax.ShapeDtypeStruct((B, Cf), jnp.float32),
        in_specs=[vmem_full],
        out_specs=vmem_full,
    )(x)

    # ---- Stage 2: tiled cosine logits (+ margin) streamed over the class dim. ----
    itemsize = 4
    vmem_need = itemsize * (2 * tn * Cf + 2 * B * tn + 2 * B * Cf + 2 * B) + (2 << 20)
    compiler_params = pltpu.CompilerParams(
        dimension_semantics=("parallel",),   # shard class tiles across v7x cores
        vmem_limit_bytes=int(min(64 << 20, max(vmem_need, 8 << 20))),
    )
    cost = pl.CostEstimate(
        flops=int(2 * B * Cf * NC + 3 * Cf * NC + 10 * B * NC),
        transcendentals=int(NC + B + (B * NC if labels is not None else 0)),
        bytes_accessed=int(itemsize * (NC * Cf + B * Cf + B * NC + B)),
    )
    out_shape = jax.ShapeDtypeStruct((B, NC), jnp.float32)

    xn_spec = pl.BlockSpec((B, Cf), lambda j: (0, 0))     # resident, fetched once
    w_spec = pl.BlockSpec((tn, Cf), lambda j: (j, 0))     # streamed, double-buffered
    out_spec = pl.BlockSpec((B, tn), lambda j: (0, j))    # lane-dense output tile

    if labels is None:
        return pl.pallas_call(
            _arcface_cos_kernel,
            out_shape=out_shape,
            grid=grid,
            in_specs=[xn_spec, w_spec],
            out_specs=out_spec,
            compiler_params=compiler_params,
            cost_estimate=cost,
        )(x_norm, weight)

    # Tiny (B,1) int32 block with a constant index_map: DMA'd once, reused by
    # every class tile.  (torch's scatter_-built one-hot == equality compare.)
    labels2d = labels.astype(jnp.int32).reshape(B, 1)
    lbl_spec = pl.BlockSpec((B, 1), lambda j: (0, 0))
    return pl.pallas_call(
        _arcface_margin_kernel,
        out_shape=out_shape,
        grid=grid,
        in_specs=[xn_spec, w_spec, lbl_spec],
        out_specs=out_spec,
        compiler_params=compiler_params,
        cost_estimate=cost,
    )(x_norm, weight, labels2d)


def _reference(x, weight, labels):
    """Pure-JAX reference mirroring ArcFaceHead.forward."""
    x_n = x / jnp.maximum(jnp.linalg.norm(x, axis=-1, keepdims=True), EPS)
    w_n = weight / jnp.maximum(jnp.linalg.norm(weight, axis=-1, keepdims=True), EPS)
    cos = jnp.clip(x_n @ w_n.T, -1.0, 1.0)
    if labels is None:
        return cos * S
    sin = jnp.sqrt(jnp.maximum(1.0 - cos * cos, 0.0))
    cos_m = jnp.where(cos > TH, cos * COS_M - sin * SIN_M, cos - MM)
    one_hot = jax.nn.one_hot(labels, weight.shape[0], dtype=cos.dtype)
    return (one_hot * cos_m + (1.0 - one_hot) * cos) * S


if __name__ == "__main__":
    # Small shapes consistent with the module: x is (batch, in_features),
    # weight is (out_features, in_features).  out_features=400 (not a multiple
    # of the 128-wide class tile) exercises the ragged last-tile path.
    B, FEAT, NUM_CLASSES = 8, 128, 400

    key = jax.random.PRNGKey(0)
    k_x, k_w, k_lbl = jax.random.split(key, 3)

    x = jax.random.normal(k_x, (B, FEAT), dtype=jnp.float32)
    # nn.init.xavier_uniform_ on (out_features, in_features)
    bound = math.sqrt(6.0 / (FEAT + NUM_CLASSES))
    weight = jax.random.uniform(k_w, (NUM_CLASSES, FEAT), jnp.float32, -bound, bound)
    labels = jax.random.randint(k_lbl, (B,), 0, NUM_CLASSES, dtype=jnp.int32)

    # labels path (training-style forward): class_tile=128 -> 4 tiles, last ragged.
    out = jax.block_until_ready(arcface_head(x, weight, labels, class_tile=128))
    ref = _reference(x, weight, labels)
    assert out.shape == (B, NUM_CLASSES)
    np.testing.assert_allclose(np.asarray(out), np.asarray(ref), rtol=1e-5, atol=5e-5)

    # labels=None path (inference logits = cos_theta * s)
    out_nl = jax.block_until_ready(arcface_head(x, weight, None, class_tile=128))
    ref_nl = _reference(x, weight, None)
    np.testing.assert_allclose(np.asarray(out_nl), np.asarray(ref_nl), rtol=1e-5, atol=5e-5)

    print("KERNEL_OK")
</pallas_src>

<mosaic_0001>
module attributes {stable_mosaic.version = 11 : i64} {
  func.func @_normalize_x_kernel(%arg0: memref<8x128xf32, #tpu.memory_space<vmem>>, %arg1: memref<8x128xf32, #tpu.memory_space<vmem>>) attributes {dimension_semantics = [], scalar_prefetch = 0 : i64, scratch_operands = 0 : i64, tpu.core_type = #tpu.core_type<tc>} {
    %c0 = arith.constant 0 : index
    %c0_0 = arith.constant 0 : index
    %0 = vector.load %arg0[%c0, %c0_0] : memref<8x128xf32, #tpu.memory_space<vmem>>, vector<8x128xf32>
    %1 = arith.mulf %0, %0 : vector<8x128xf32>
    %cst = arith.constant dense<0.000000e+00> : vector<8xf32>
    %2 = vector.multi_reduction <add>, %1, %cst [1] : vector<8x128xf32> to vector<8xf32>
    %3 = vector.shape_cast %2 : vector<8xf32> to vector<8x1xf32>
    %cst_1 = arith.constant 1.000000e-24 : f32
    %4 = vector.broadcast %cst_1 : f32 to vector<8x1xf32>
    %5 = arith.maximumf %3, %4 : vector<8x1xf32>
    %6 = math.rsqrt %5 : vector<8x1xf32>
    %7 = vector.broadcast %6 : vector<8x1xf32> to vector<8x128xf32>
    %8 = arith.mulf %0, %7 : vector<8x128xf32>
    %c0_2 = arith.constant 0 : index
    %c0_3 = arith.constant 0 : index
    %9 = vector.load %arg1[%c0_2, %c0_3] : memref<8x128xf32, #tpu.memory_space<vmem>>, vector<8x128xf32>
    tpu.vector_store %arg1[%c0_2, %c0_3], %8 {strides = array<i32>} : memref<8x128xf32, #tpu.memory_space<vmem>>, vector<8x128xf32>,
    return
  }
}

</mosaic_0001>

<llo_original>
// kernel: tpu_custom_call.1
$region0: #{tpu_custom_call.1}
  #allocation0 [shape = 'u32[]', space=smem, size = 0x4, offset = 0x4, fixed_abs, tag = 'smem constant byte address 0x4 - core index']
  #allocation1 [shape = 'u32[72,128]{1,0:T(1,128)}', space=vmem, size = 0x9000, scoped, tag = 'internal scratch']
  %s0 = inlined_call_operand.hbm [shape: f32[8,128], index: 0, kind: input, shape index: {}]
  %s1 = inlined_call_operand.hbm [shape: f32[8,128], index: 1, kind: output, shape index: {}]
  %s2 = sld [smem:[#allocation0]]
  $region18: #{tpu_custom_call.1} parent=0
    _
  %s4 = ssub.s32 1, %s2
  %s5 = scalar_select 0, %s4, %s2
  $region1: #{tpu_custom_call.1} parent=0
    #allocation2 [shape = 'u8[4096]{0}', space=vmem, size = 0x1000, scoped, tag = 'input window, operand 0, single buffered']
    #allocation3 [shape = 's32[1]{0}', space=sflag, size = 0x4, scoped, tag = 'scoped memory for tpu_custom_call.1']
    #allocation4 [shape = 's32[1]{0}', space=sflag, size = 0x4, scoped, tag = 'scoped memory for tpu_custom_call.1']
    #allocation5 [shape = 'u8[4096]{0}', space=vmem, size = 0x1000, scoped, tag = 'output window, operand 0, single buffered']
    %6 = vsyncpa [#allocation3], 0
    %7 = vsyncpa [#allocation4], 0
    // Predicated region
    $region2: #{tpu_custom_call.1} parent=1 // pred_check
      _
    $region3: #{tpu_custom_call.1} parent=1 // pred_check_branch
      %9 = sbr.rel (0) target = $region5
    $region4: #{tpu_custom_call.1} parent=1 // pred_region
      %11 = vsyncadd [#allocation3], 0
      %s13 = sshll.u32 %s0, 4
      %s14 = int_to_ptr.hbm [resolvable:$true] %s13
      %s15 = sshll.u32 [#allocation2], 4
      %s16 = int_to_ptr.vmem [resolvable:$true] %s15
      %18 = dma.hbm_to_vmem [thread:$0]  %s14, 128, %s16, [#allocation3]
    $region5: #{tpu_custom_call.1} parent=1 // pred_fallthru
      _
    // Predicated region
    $region6: #{tpu_custom_call.1} parent=1 // pred_check
      _
    $region7: #{tpu_custom_call.1} parent=1 // pred_check_branch
      %20 = sbr.rel (0) target = $region9
    $region8: #{tpu_custom_call.1} parent=1 // pred_region
      %22 = dma.done [#allocation3], 128
    $region9: #{tpu_custom_call.1} parent=1 // pred_fallthru
      _
    %v23 = vld [vmem:[#allocation2] sm:$0xff]
    %v24 = vmul.f32 %v23, %v23
    %25 = vadd.xlane.f32.xlu0 %v24
    %v26 = vpop.xlane.xlu0 %25
    %v27 = vmax.f32 %v26, 1e-24
    %v28 = vrsqrt.pop %v27
    %v29 = vmul.f32 %v28, %v27
    %v30 = vmul.f32 %v29, %v28
    %v31 = vmul.f32 0.5, %v30
    %v32 = vsub.f32 1.5, %v31
    %v33 = vmul.f32 %v28, %v32
    %vm34 = vweird.f32 %v27
    %vm35 = vweird.f32 %v28
    %vm36 = vmor %vm34, %vm35
    %v37 = vsel %vm36, %v28, %v33
    %v38 = vmul.f32 %v23, %v37
    %39 = vst [vmem:[#allocation5] sm:$0xff] %v38
    // Predicated region
    $region10: #{tpu_custom_call.1} parent=1 // pred_check
      _
    $region11: #{tpu_custom_call.1} parent=1 // pred_check_branch
      %41 = sbr.rel (0) target = $region13
    $region12: #{tpu_custom_call.1} parent=1 // pred_region
      %43 = vsyncadd [#allocation4], 0
      %s45 = sshll.u32 [#allocation5], 4
      %s46 = int_to_ptr.vmem [resolvable:$true] %s45
      %s47 = sshll.u32 %s1, 4
      %s48 = int_to_ptr.hbm [resolvable:$true] %s47
      %50 = dma.vmem_to_hbm [thread:$0]  %s46, 128, %s48, [#allocation4]
    $region13: #{tpu_custom_call.1} parent=1 // pred_fallthru
      _
    // Predicated region
    $region14: #{tpu_custom_call.1} parent=1 // pred_check
      _
    $region15: #{tpu_custom_call.1} parent=1 // pred_check_branch
      %52 = sbr.rel (0) target = $region17
    $region16: #{tpu_custom_call.1} parent=1 // pred_region
      %54 = dma.done [#allocation4], 128
    $region17: #{tpu_custom_call.1} parent=1 // pred_fallthru
      _
    %55 = vsyncpa [#allocation3], 1
    %56 = vsyncpa [#allocation4], 1

</llo_original>
